<compile_context>
chip_gen: v7x
topology: tpu7x:2x2x1
jax: 0.10.0
libtpu: 0.0.40
codegen_flags: <defaults>
</compile_context>

<pallas_src>
import functools

import jax
import jax.numpy as jnp
from jax import lax
from jax.experimental import pallas as pl
from jax.experimental.pallas import tpu as pltpu

# BinaryTverskyLoss defaults used by TverskyLoss(**{}) in the reference module.
ALPHA = 0.7
SMOOTH = 1e-5

LANE = 128
_TARGET_BLOCK_BYTES = 4 * 1024 * 1024   # per-input block (f32-equivalent), v7x-safe
_MAX_TILE_ROWS = 2048
_VMEM_LIMIT_BYTES = 48 * 1024 * 1024


def _tversky_sums_kernel(p_ref, t_ref, o_ref, acc_a, acc_b, acc_c, *,
                         tile_rows, tiles_per_split, num_blocks, valid_rows,
                         needs_gate, needs_row_mask):
    """Accumulates per-class (tp, sum(p), sum(t)) for one (batch, split) pair."""
    sp = pl.program_id(1)
    s = pl.program_id(2)
    ns = pl.num_programs(2)
    g = sp * tiles_per_split + s          # global spatial tile index

    @pl.when(s == 0)
    def _():
        acc_a[...] = jnp.zeros_like(acc_a)
        acc_b[...] = jnp.zeros_like(acc_b)
        acc_c[...] = jnp.zeros_like(acc_c)

    def _accumulate():
        logits = p_ref[0].astype(jnp.float32)     # (C, tile_rows, 128)
        target = t_ref[0].astype(jnp.float32)     # (C, tile_rows, 128)

        if needs_row_mask:
            # Zero the Pallas boundary-block garbage rows (global row >= R).
            # Must happen BEFORE max/exp so garbage NaN/Inf cannot propagate.
            # Zeroed logits yield probs == 1/C exactly; the glue subtracts that
            # analytically, so no post-softmax masking is needed anywhere.
            row = lax.broadcasted_iota(jnp.int32, (tile_rows, LANE), 0)
            ok = (g * tile_rows + row) < valid_rows
            logits = jnp.where(ok[None], logits, 0.0)
            target = jnp.where(ok[None], target, 0.0)

        # softmax over the class (slab) axis -- pure elementwise VPU work
        # across C lane-dense vreg slabs; the divide goes to the EUP.
        m = jnp.max(logits, axis=0, keepdims=True)
        e = jnp.exp(logits - m)
        probs = e * pl.reciprocal(jnp.sum(e, axis=0, keepdims=True), approx=True)

        # p == 1 algebra: fp = sum(p) - tp, fn = sum(t) - tp (applied in glue).
        # Reduce only over the sublane (row) axis; the cross-lane collapse is
        # deferred to the glue (kernel output stays lane-dense).
        acc_a[...] += jnp.sum(probs * target, axis=1)   # -> tp      (C, 128)
        acc_b[...] += jnp.sum(probs, axis=1)            # -> sum(p)  (C, 128)
        acc_c[...] += jnp.sum(target, axis=1)           # -> sum(t)  (C, 128)

    if needs_gate:
        # Uneven spatial split: trailing clamped tiles are skipped entirely.
        pl.when(g < num_blocks)(_accumulate)
    else:
        _accumulate()

    @pl.when(s == ns - 1)
    def _():
        o_ref[0, 0, 0, :, :] = acc_a[...]
        o_ref[0, 0, 1, :, :] = acc_b[...]
        o_ref[0, 0, 2, :, :] = acc_c[...]


def tversky_loss(predict, target, *, alpha=ALPHA, gamma=None, smooth=SMOOTH,
                 reduction='mean', k=80, weight=None, ignore_index=None,
                 tile_rows=None, nsplit=None):
    """predict, target: (N, C, *spatial) -> loss per the TverskyLoss module."""
    assert predict.shape == target.shape, 'predict & target shape do not match'
    N, C = predict.shape[0], predict.shape[1]
    S = 1
    for d in predict.shape[2:]:
        S *= d

    p = predict.reshape(N, C, S)
    t = target.reshape(N, C, S)

    R = pl.cdiv(S, LANE)                      # spatial rows of 128 lanes
    # Lane-boundary zero-pad ONLY (no tile-boundary pad of the full tensor).
    if R * LANE != S:
        p = jnp.pad(p, ((0, 0), (0, 0), (0, R * LANE - S)))
        t = jnp.pad(t, ((0, 0), (0, 0), (0, R * LANE - S)))
    p = p.reshape(N, C, R, LANE)
    t = t.reshape(N, C, R, LANE)

    # Spatial tile: biggest block keeping the per-input block <= ~4 MiB
    # (f32-equivalent) so 2 inputs x 2 buffers + f32 temporaries stay well
    # inside the 48 MiB scoped VMEM even on v7x (64 MiB physical).
    if tile_rows is None:
        cap = _TARGET_BLOCK_BYTES // (C * LANE * 4)
        tile_rows = max(8, min(_MAX_TILE_ROWS, (cap // 8) * 8))
    else:
        assert tile_rows % 8 == 0, 'tile_rows must be a multiple of 8'
    if R <= tile_rows:
        tile_rows = R                         # single spatial tile per image

    num_blocks = pl.cdiv(R, tile_rows)
    needs_row_mask = (num_blocks * tile_rows != R)

    # Optional second *parallel* grid axis splitting the spatial range so a
    # v7x megacore gets two units of parallel work when N alone cannot be
    # split evenly across both TensorCores.  Free on v5e/v6e (single TC).
    if nsplit is None:
        nsplit = 2 if (N % 2 == 1 and num_blocks >= 2) else 1
    nsplit = max(1, min(nsplit, num_blocks))
    tiles_per_split = pl.cdiv(num_blocks, nsplit)
    needs_gate = (nsplit * tiles_per_split != num_blocks)

    if needs_gate:
        def in_map(n, sp_, s):
            return (n, 0, jnp.minimum(sp_ * tiles_per_split + s, num_blocks - 1), 0)
    else:
        def in_map(n, sp_, s):
            return (n, 0, sp_ * tiles_per_split + s, 0)

    kernel = functools.partial(
        _tversky_sums_kernel,
        tile_rows=tile_rows,
        tiles_per_split=tiles_per_split,
        num_blocks=num_blocks,
        valid_rows=R,
        needs_gate=needs_gate,
        needs_row_mask=needs_row_mask,
    )

    sums = pl.pallas_call(
        kernel,
        out_shape=jax.ShapeDtypeStruct((N, nsplit, 3, C, LANE), jnp.float32),
        grid_spec=pltpu.PrefetchScalarGridSpec(
            num_scalar_prefetch=0,
            grid=(N, nsplit, tiles_per_split),
            in_specs=[
                pl.BlockSpec((1, C, tile_rows, LANE), in_map),
                pl.BlockSpec((1, C, tile_rows, LANE), in_map),
            ],
            out_specs=pl.BlockSpec((1, 1, 3, C, LANE),
                                   lambda n, sp_, s: (n, sp_, 0, 0, 0)),
            scratch_shapes=[
                pltpu.VMEM((C, LANE), jnp.float32),   # sum(p*t) per class, lane
                pltpu.VMEM((C, LANE), jnp.float32),   # sum(p)   per class, lane
                pltpu.VMEM((C, LANE), jnp.float32),   # sum(t)   per class, lane
            ],
        ),
        compiler_params=pltpu.CompilerParams(
            dimension_semantics=("parallel", "parallel", "arbitrary"),
            vmem_limit_bytes=_VMEM_LIMIT_BYTES,
        ),
    )(p, t)

    # ---- tiny glue on (N, C)-sized arrays -----------------------------------
    abc = jnp.sum(sums, axis=(1, -1))                     # (N, 3, C)
    tp = abc[:, 0, :]
    # Every zero-logit padded position (lane pad + sanitized boundary rows)
    # contributed exactly 1/C to sum(p) and nothing to tp / sum(t).
    pad_positions = num_blocks * tile_rows * LANE - S
    sum_p = abc[:, 1, :] - pad_positions / C
    sum_t = abc[:, 2, :]
    fp = sum_p - tp                                       # p == 1 algebra
    fn = sum_t - tp
    loss = 1.0 - (tp + smooth) / (tp + alpha * fp + (1.0 - alpha) * fn + smooth)
    if gamma is not None:
        loss = loss ** gamma

    if reduction == 'mean':
        per_class = jnp.mean(loss, axis=0)                # (C,)
    elif reduction == 'sum':
        per_class = jnp.sum(loss, axis=0)                 # (C,)
    elif reduction == 'none':
        per_class = loss                                  # (N, C)
    elif reduction == 'topk':
        kk = max(1, int(N * k / 100))
        per_class = jnp.mean(lax.top_k(loss.T, kk)[0], axis=-1)   # (C,)
    else:
        raise Exception('Unexpected reduction {}'.format(reduction))

    if weight is not None:
        per_class = per_class * jnp.asarray(weight, jnp.float32)
    if ignore_index is not None:
        keep = (jnp.arange(C) != ignore_index).astype(jnp.float32)
        return jnp.sum(per_class * keep, axis=-1) / (C - 1)
    return jnp.sum(per_class, axis=-1) / C


def _reference(predict, target, alpha=ALPHA, smooth=SMOOTH):
    # Pure-JAX reference mirroring the PyTorch module (defaults, p=1).
    N, C = predict.shape[0], predict.shape[1]
    probs = jax.nn.softmax(predict.astype(jnp.float32), axis=1).reshape(N, C, -1)
    tg = target.astype(jnp.float32).reshape(N, C, -1)
    tp = jnp.sum(probs * tg, axis=-1)
    fp = jnp.sum((1.0 - tg) * probs, axis=-1)
    fn = jnp.sum(tg * (1.0 - probs), axis=-1)
    loss = 1.0 - (tp + smooth) / (tp + alpha * fp + (1.0 - alpha) * fn + smooth)
    return jnp.sum(jnp.mean(loss, axis=0)) / C


def _make_inputs(key, n, c, h, w, dtype=jnp.float32):
    k1, k2 = jax.random.split(key)
    predict = jax.random.normal(k1, (n, c, h, w), dtype=jnp.float32).astype(dtype)
    labels = jax.random.randint(k2, (n, h, w), 0, c)
    target = jax.nn.one_hot(labels, c, dtype=dtype)       # (N, H, W, C)
    target = jnp.transpose(target, (0, 3, 1, 2))          # (N, C, H, W)
    return predict, target


if __name__ == "__main__":
    key = jax.random.PRNGKey(0)
    k1, k2, k3 = jax.random.split(key, 3)

    # 1) Small single-tile path (no padding, no split): N=2, C=4, 16x16.
    p1, t1 = _make_inputs(k1, 2, 4, 16, 16)
    out1 = jax.block_until_ready(tversky_loss(p1, t1))
    ref1 = _reference(p1, t1)
    assert jnp.allclose(out1, ref1, rtol=5e-3, atol=5e-3), (out1, ref1)

    # 2) Multi-tile path with a partial boundary tile (in-kernel row sanitize
    #    + analytic 1/C pad correction): N=2, C=3, 48x48, forced 8-row tiles.
    p2, t2 = _make_inputs(k2, 2, 3, 48, 48)
    out2 = jax.block_until_ready(tversky_loss(p2, t2, tile_rows=8))
    ref2 = _reference(p2, t2)
    assert jnp.allclose(out2, ref2, rtol=5e-3, atol=5e-3), (out2, ref2)

    # 3) Lane padding (S % 128 != 0), odd batch -> 2-way parallel spatial split
    #    with a gated (clamped) trailing tile, bf16 inputs: N=1, C=4, 52x52.
    p3, t3 = _make_inputs(k3, 1, 4, 52, 52, dtype=jnp.bfloat16)
    out3 = jax.block_until_ready(tversky_loss(p3, t3, tile_rows=8))
    ref3 = _reference(p3, t3)
    assert jnp.allclose(out3, ref3, rtol=5e-3, atol=5e-3), (out3, ref3)

    print("KERNEL_OK")
</pallas_src>

<mosaic_0001>
module attributes {stable_mosaic.version = 11 : i64} {
  func.func @_tversky_sums_kernel(%arg0: i32, %arg1: i32, %arg2: i32, %arg3: memref<1x4x2x128xf32, #tpu.memory_space<vmem>>, %arg4: memref<1x4x2x128xf32, #tpu.memory_space<vmem>>, %arg5: memref<1x1x3x4x128xf32, #tpu.memory_space<vmem>>, %arg6: memref<4x128xf32, #tpu.memory_space<vmem>>, %arg7: memref<4x128xf32, #tpu.memory_space<vmem>>, %arg8: memref<4x128xf32, #tpu.memory_space<vmem>>) attributes {dimension_semantics = [#tpu.dimension_semantics<parallel>, #tpu.dimension_semantics<parallel>, #tpu.dimension_semantics<arbitrary>], iteration_bounds = array<i64: 2, 1, 1>, scalar_prefetch = 0 : i64, scratch_operands = 3 : i64, tpu.core_type = #tpu.core_type<tc>, window_params = [{transform_indices = @transform_0, window_bounds = array<i64: 1, 4, 2, 128>}, {transform_indices = @transform_1, window_bounds = array<i64: 1, 4, 2, 128>}, {transform_indices = @transform_2, window_bounds = array<i64: 1, 1, 3, 4, 128>}]} {
    %c0_i32 = arith.constant 0 : i32
    %0 = arith.cmpi eq, %arg2, %c0_i32 : i32
    %1 = arith.extui %0 : i1 to i32
    %c0_i32_0 = arith.constant 0 : i32
    %2 = arith.cmpi ne, %1, %c0_i32_0 : i32
    scf.if %2 {
      %cst_26 = arith.constant 0.000000e+00 : f32
      %33 = vector.broadcast %cst_26 : f32 to vector<4x128xf32>
      %c0_27 = arith.constant 0 : index
      %c0_28 = arith.constant 0 : index
      %34 = vector.load %arg6[%c0_27, %c0_28] : memref<4x128xf32, #tpu.memory_space<vmem>>, vector<4x128xf32>
      tpu.vector_store %arg6[%c0_27, %c0_28], %33 {strides = array<i32>} : memref<4x128xf32, #tpu.memory_space<vmem>>, vector<4x128xf32>,
      %cst_29 = arith.constant 0.000000e+00 : f32
      %35 = vector.broadcast %cst_29 : f32 to vector<4x128xf32>
      %c0_30 = arith.constant 0 : index
      %c0_31 = arith.constant 0 : index
      %36 = vector.load %arg7[%c0_30, %c0_31] : memref<4x128xf32, #tpu.memory_space<vmem>>, vector<4x128xf32>
      tpu.vector_store %arg7[%c0_30, %c0_31], %35 {strides = array<i32>} : memref<4x128xf32, #tpu.memory_space<vmem>>, vector<4x128xf32>,
      %cst_32 = arith.constant 0.000000e+00 : f32
      %37 = vector.broadcast %cst_32 : f32 to vector<4x128xf32>
      %c0_33 = arith.constant 0 : index
      %c0_34 = arith.constant 0 : index
      %38 = vector.load %arg8[%c0_33, %c0_34] : memref<4x128xf32, #tpu.memory_space<vmem>>, vector<4x128xf32>
      tpu.vector_store %arg8[%c0_33, %c0_34], %37 {strides = array<i32>} : memref<4x128xf32, #tpu.memory_space<vmem>>, vector<4x128xf32>,
    } else {
    }
    %c0 = arith.constant 0 : index
    %c0_1 = arith.constant 0 : index
    %c0_2 = arith.constant 0 : index
    %c0_3 = arith.constant 0 : index
    %3 = vector.load %arg3[%c0, %c0_1, %c0_2, %c0_3] : memref<1x4x2x128xf32, #tpu.memory_space<vmem>>, vector<1x4x2x128xf32>
    %4 = vector.shape_cast %3 : vector<1x4x2x128xf32> to vector<4x2x128xf32>
    %c0_4 = arith.constant 0 : index
    %c0_5 = arith.constant 0 : index
    %c0_6 = arith.constant 0 : index
    %c0_7 = arith.constant 0 : index
    %5 = vector.load %arg4[%c0_4, %c0_5, %c0_6, %c0_7] : memref<1x4x2x128xf32, #tpu.memory_space<vmem>>, vector<1x4x2x128xf32>
    %6 = vector.shape_cast %5 : vector<1x4x2x128xf32> to vector<4x2x128xf32>
    %cst = arith.constant dense<0xFF800000> : vector<2x128xf32>
    %7 = vector.multi_reduction <maximumf>, %4, %cst [0] : vector<4x2x128xf32> to vector<2x128xf32>
    %8 = vector.shape_cast %7 : vector<2x128xf32> to vector<1x2x128xf32>
    %9 = vector.broadcast %8 : vector<1x2x128xf32> to vector<4x2x128xf32>
    %10 = arith.subf %4, %9 : vector<4x2x128xf32>
    %11 = math.exp %10 : vector<4x2x128xf32>
    %cst_8 = arith.constant dense<0.000000e+00> : vector<2x128xf32>
    %12 = vector.multi_reduction <add>, %11, %cst_8 [0] : vector<4x2x128xf32> to vector<2x128xf32>
    %13 = vector.shape_cast %12 : vector<2x128xf32> to vector<1x2x128xf32>
    %14 = tpu.reciprocal %13 {approx = true} : vector<1x2x128xf32> -> vector<1x2x128xf32>
    %15 = vector.broadcast %14 : vector<1x2x128xf32> to vector<4x2x128xf32>
    %16 = arith.mulf %11, %15 : vector<4x2x128xf32>
    %c0_9 = arith.constant 0 : index
    %c0_10 = arith.constant 0 : index
    %17 = vector.load %arg6[%c0_9, %c0_10] : memref<4x128xf32, #tpu.memory_space<vmem>>, vector<4x128xf32>
    %18 = arith.mulf %16, %6 : vector<4x2x128xf32>
    %cst_11 = arith.constant dense<0.000000e+00> : vector<4x128xf32>
    %19 = vector.multi_reduction <add>, %18, %cst_11 [1] : vector<4x2x128xf32> to vector<4x128xf32>
    %20 = arith.addf %17, %19 : vector<4x128xf32>
    %c0_12 = arith.constant 0 : index
    %c0_13 = arith.constant 0 : index
    %21 = vector.load %arg6[%c0_12, %c0_13] : memref<4x128xf32, #tpu.memory_space<vmem>>, vector<4x128xf32>
    tpu.vector_store %arg6[%c0_12, %c0_13], %20 {strides = array<i32>} : memref<4x128xf32, #tpu.memory_space<vmem>>, vector<4x128xf32>,
    %c0_14 = arith.constant 0 : index
    %c0_15 = arith.constant 0 : index
    %22 = vector.load %arg7[%c0_14, %c0_15] : memref<4x128xf32, #tpu.memory_space<vmem>>, vector<4x128xf32>
    %cst_16 = arith.constant dense<0.000000e+00> : vector<4x128xf32>
    %23 = vector.multi_reduction <add>, %16, %cst_16 [1] : vector<4x2x128xf32> to vector<4x128xf32>
    %24 = arith.addf %22, %23 : vector<4x128xf32>
    %c0_17 = arith.constant 0 : index
    %c0_18 = arith.constant 0 : index
    %25 = vector.load %arg7[%c0_17, %c0_18] : memref<4x128xf32, #tpu.memory_space<vmem>>, vector<4x128xf32>
    tpu.vector_store %arg7[%c0_17, %c0_18], %24 {strides = array<i32>} : memref<4x128xf32, #tpu.memory_space<vmem>>, vector<4x128xf32>,
    %c0_19 = arith.constant 0 : index
    %c0_20 = arith.constant 0 : index
    %26 = vector.load %arg8[%c0_19, %c0_20] : memref<4x128xf32, #tpu.memory_space<vmem>>, vector<4x128xf32>
    %cst_21 = arith.constant dense<0.000000e+00> : vector<4x128xf32>
    %27 = vector.multi_reduction <add>, %6, %cst_21 [1] : vector<4x2x128xf32> to vector<4x128xf32>
    %28 = arith.addf %26, %27 : vector<4x128xf32>
    %c0_22 = arith.constant 0 : index
    %c0_23 = arith.constant 0 : index
    %29 = vector.load %arg8[%c0_22, %c0_23] : memref<4x128xf32, #tpu.memory_space<vmem>>, vector<4x128xf32>
    tpu.vector_store %arg8[%c0_22, %c0_23], %28 {strides = array<i32>} : memref<4x128xf32, #tpu.memory_space<vmem>>, vector<4x128xf32>,
    %c0_i32_24 = arith.constant 0 : i32
    %30 = arith.cmpi eq, %arg2, %c0_i32_24 : i32
    %31 = arith.extui %30 : i1 to i32
    %c0_i32_25 = arith.constant 0 : i32
    %32 = arith.cmpi ne, %31, %c0_i32_25 : i32
    scf.if %32 {
      %c0_26 = arith.constant 0 : index
      %c0_27 = arith.constant 0 : index
      %33 = vector.load %arg6[%c0_26, %c0_27] : memref<4x128xf32, #tpu.memory_space<vmem>>, vector<4x128xf32>
      %c0_28 = arith.constant 0 : index
      %c0_29 = arith.constant 0 : index
      %c0_30 = arith.constant 0 : index
      %c0_31 = arith.constant 0 : index
      %c0_32 = arith.constant 0 : index
      %34 = vector.load %arg5[%c0_28, %c0_29, %c0_30, %c0_31, %c0_32] : memref<1x1x3x4x128xf32, #tpu.memory_space<vmem>>, vector<1x1x1x4x128xf32>
      %35 = vector.shape_cast %34 : vector<1x1x1x4x128xf32> to vector<4x128xf32>
      %36 = vector.shape_cast %33 : vector<4x128xf32> to vector<1x1x1x4x128xf32>
      tpu.vector_store %arg5[%c0_28, %c0_29, %c0_30, %c0_31, %c0_32], %36 {strides = array<i32>} : memref<1x1x3x4x128xf32, #tpu.memory_space<vmem>>, vector<1x1x1x4x128xf32>,
      %c0_33 = arith.constant 0 : index
      %c0_34 = arith.constant 0 : index
      %37 = vector.load %arg7[%c0_33, %c0_34] : memref<4x128xf32, #tpu.memory_space<vmem>>, vector<4x128xf32>
      %c0_35 = arith.constant 0 : index
      %c0_36 = arith.constant 0 : index
      %c1 = arith.constant 1 : index
      %c0_37 = arith.constant 0 : index
      %c0_38 = arith.constant 0 : index
      %38 = vector.load %arg5[%c0_35, %c0_36, %c1, %c0_37, %c0_38] : memref<1x1x3x4x128xf32, #tpu.memory_space<vmem>>, vector<1x1x1x4x128xf32>
      %39 = vector.shape_cast %38 : vector<1x1x1x4x128xf32> to vector<4x128xf32>
      %40 = vector.shape_cast %37 : vector<4x128xf32> to vector<1x1x1x4x128xf32>
      tpu.vector_store %arg5[%c0_35, %c0_36, %c1, %c0_37, %c0_38], %40 {strides = array<i32>} : memref<1x1x3x4x128xf32, #tpu.memory_space<vmem>>, vector<1x1x1x4x128xf32>,
      %c0_39 = arith.constant 0 : index
      %c0_40 = arith.constant 0 : index
      %41 = vector.load %arg8[%c0_39, %c0_40] : memref<4x128xf32, #tpu.memory_space<vmem>>, vector<4x128xf32>
      %c0_41 = arith.constant 0 : index
      %c0_42 = arith.constant 0 : index
      %c2 = arith.constant 2 : index
      %c0_43 = arith.constant 0 : index
      %c0_44 = arith.constant 0 : index
      %42 = vector.load %arg5[%c0_41, %c0_42, %c2, %c0_43, %c0_44] : memref<1x1x3x4x128xf32, #tpu.memory_space<vmem>>, vector<1x1x1x4x128xf32>
      %43 = vector.shape_cast %42 : vector<1x1x1x4x128xf32> to vector<4x128xf32>
      %44 = vector.shape_cast %41 : vector<4x128xf32> to vector<1x1x1x4x128xf32>
      tpu.vector_store %arg5[%c0_41, %c0_42, %c2, %c0_43, %c0_44], %44 {strides = array<i32>} : memref<1x1x3x4x128xf32, #tpu.memory_space<vmem>>, vector<1x1x1x4x128xf32>,
    } else {
    }
    return
  }
  func.func @transform_0(%arg0: i32, %arg1: i32, %arg2: i32) -> (i32, i32, i32, i32) {
    %c1_i32 = arith.constant 1 : i32
    %0 = arith.muli %arg1, %c1_i32 : i32
    %1 = arith.addi %0, %arg2 : i32
    %c0_i32 = arith.constant 0 : i32
    %c0_i32_0 = arith.constant 0 : i32
    %c0_i32_1 = arith.constant 0 : i32
    return %arg0, %c0_i32, %1, %c0_i32_0 : i32, i32, i32, i32
  }
  func.func @transform_1(%arg0: i32, %arg1: i32, %arg2: i32) -> (i32, i32, i32, i32) {
    %c1_i32 = arith.constant 1 : i32
    %0 = arith.muli %arg1, %c1_i32 : i32
    %1 = arith.addi %0, %arg2 : i32
    %c0_i32 = arith.constant 0 : i32
    %c0_i32_0 = arith.constant 0 : i32
    %c0_i32_1 = arith.constant 0 : i32
    return %arg0, %c0_i32, %1, %c0_i32_0 : i32, i32, i32, i32
  }
  func.func @transform_2(%arg0: i32, %arg1: i32, %arg2: i32) -> (i32, i32, i32, i32, i32) {
    %c0_i32 = arith.constant 0 : i32
    %c0_i32_0 = arith.constant 0 : i32
    %c0_i32_1 = arith.constant 0 : i32
    %c0_i32_2 = arith.constant 0 : i32
    return %arg0, %arg1, %c0_i32, %c0_i32_0, %c0_i32_1 : i32, i32, i32, i32, i32
  }
}

</mosaic_0001>

<llo_original>
// kernel: tpu_custom_call.1
$region0: #{tpu_custom_call.1}
  #allocation0 [shape = 'u32[]', space=smem, size = 0x4, offset = 0x4, fixed_abs, tag = 'smem constant byte address 0x4 - core index']
  #allocation1 [shape = 'u32[144,128]{1,0:T(1,128)}', space=vmem, size = 0x12000, scoped, tag = 'internal scratch']
  #allocation2 [shape = 'f32[4,128]{1,0:T(4,128)}', space=vmem, size = 0x800, scoped, tag = 'scratch operand']
  #allocation3 [shape = 'f32[4,128]{1,0:T(4,128)}', space=vmem, size = 0x800, scoped, tag = 'scratch operand']
  #allocation4 [shape = 'f32[4,128]{1,0:T(4,128)}', space=vmem, size = 0x800, scoped, tag = 'scratch operand']
  %s0 = inlined_call_operand.hbm [shape: f32[2,4,2,128], index: 0, kind: input, shape index: {}]
  %s1 = inlined_call_operand.hbm [shape: f32[2,4,2,128], index: 1, kind: input, shape index: {}]
  %s2 = inlined_call_operand.hbm [shape: f32[2,1,3,4,128], index: 2, kind: output, shape index: {}]
  %s3 = sld [smem:[#allocation0]]
  $region57: #{tpu_custom_call.1} parent=0
    _
  %s5 = ssub.s32 1, %s3
  %s6 = scalar_select 0, %s5, %s3
  $region1: #{tpu_custom_call.1} parent=0
    #allocation5 [shape = 'u8[8192]{0}', space=vmem, size = 0x2000, scoped, tag = 'input window, operand 0']
    #allocation6 [shape = 's32[2]{0}', space=sflag, size = 0x8, scoped, tag = 'scoped memory for tpu_custom_call.1']
    #allocation7 [shape = 's32[2]{0}', space=sflag, size = 0x8, scoped, tag = 'scoped memory for tpu_custom_call.1']
    #allocation8 [shape = 'u8[8192]{0}', space=vmem, size = 0x2000, scoped, tag = 'input window, operand 1']
    #allocation9 [shape = 's32[2]{0}', space=sflag, size = 0x8, scoped, tag = 'scoped memory for tpu_custom_call.1']
    #allocation10 [shape = 'u8[12288]{0}', space=vmem, size = 0x3000, scoped, tag = 'output window, operand 0']
    %7 = vsyncpa [#allocation6], 0
    %s8 = scalar_lea.sflag [#allocation6], 1
    %9 = vsyncpa %s8, 0
    %10 = vsyncpa [#allocation9], 0
    %s11 = scalar_lea.sflag [#allocation9], 1
    %12 = vsyncpa %s11, 0
    %13 = vsyncpa [#allocation7], 0
    %s14 = scalar_lea.sflag [#allocation7], 1
    %15 = vsyncpa %s14, 0
    loop: start=0, step=1, limit=4
    $region2: #{tpu_custom_call.1} parent=1 // loop_pre_header
      _
    $region3: #{tpu_custom_call.1} parent=1 // loop_header
      %s17 = sphi 0, %s21
      %p18 = scmp.ge.s32.totalorder %s17, 4
      %s24 = sphi 0, %s43
      %s25 = sphi 0, %s39
      %s26 = sphi 0, %s35
      %s27 = sphi 0, %s24
      %s28 = sphi 0, %s25
      %s29 = sphi 0, %s26
      %s30 = sphi 0, %s27
      %s31 = sphi 0, %s28
      %s32 = sphi 0, %s29
      %s50 = sphi 0, %s52
      %s53 = sphi 0, %s50
      %s54 = sphi 0, %s53
      %s70 = sphi 0, %s54
      %s80 = sphi 0, %s82
      %s83 = sphi 0, %s80
      %s84 = sphi 0, %s83
      %s100 = sphi 0, %s84
      %s108 = sphi 0, %s110
      %s111 = sphi 0, %s108
      %s112 = sphi 0, %s111
      %s128 = sphi 0, %s112
    $region4: #{tpu_custom_call.1} parent=1 // loop_header_branch
      %20 = sbr.rel (%p18) target = $region8
    $region5: #{tpu_custom_call.1} parent=1 // loop_body
      %s22 = ssub.s32 %s17, 1
      %s23 = ssub.s32 %s17, 2
      %s33 = sadd.s32 1, %s26
      %p34 = scmp.ge.s32.totalorder %s33, 1
      %s35 = scalar_select %p34, 0, %s33
      %s36 = sadd.s32 1, %s25
      %s37 = scalar_select %p34, %s36, %s25
      %p38 = scmp.ge.s32.totalorder %s37, 1
      %s39 = scalar_select %p38, 0, %s37
      %s40 = sadd.s32 1, %s24
      %s41 = scalar_select %p38, %s40, %s24
      %p42 = scmp.ge.s32.totalorder %s41, 2
      %s43 = scalar_select %p42, 0, %s41
      %s44 = sadd.s32 %s25, %s26
      %s45 = sadd.s32 %s39, %s35
      %s46 = ssub.s32 %s24, %s43
      %s47 = ssub.s32 %s44, %s45
      %s48 = sor.u32 %s46, %s47
      %p49 = scmp.eq.s32.totalorder %s48, 0
      %s51 = sadd.s32 %s50, 1
      %s52 = scalar_select %p49, %s50, %s51
      %p55 = pneg %p49
      %p56 = scmp.eq.s32.totalorder %s17, 1
      %p57 = por %p55, %p56
      %p58 = scmp.ne.s32.totalorder %s50, %s53
      %p59 = scmp.eq.s32.totalorder %s17, 0
      %p60 = por %p58, %p59
      %p61 = scmp.ne.s32.totalorder %s50, %s53
      %p62 = scmp.eq.s32.totalorder %s22, 1
      %p63 = por %p61, %p62
      %p64 = scmp.ne.s32.totalorder %s53, %s54
      %p65 = scmp.eq.s32.totalorder %s22, 0
      %p66 = por %p64, %p65
      %p67 = scmp.ne.s32.totalorder %s53, %s54
      %p68 = scmp.eq.s32.totalorder %s23, 1
      %p69 = por %p67, %p68
      %p71 = scmp.ne.s32.totalorder %s54, %s70
      %p72 = scmp.eq.s32.totalorder %s23, 0
      %p73 = por %p71, %p72
      %s74 = sadd.s32 %s25, %s26
      %s75 = sadd.s32 %s39, %s35
      %s76 = ssub.s32 %s24, %s43
      %s77 = ssub.s32 %s74, %s75
      %s78 = sor.u32 %s76, %s77
      %p79 = scmp.eq.s32.totalorder %s78, 0
      %s81 = sadd.s32 %s80, 1
      %s82 = scalar_select %p79, %s80, %s81
      %p85 = pneg %p79
      %p86 = scmp.eq.s32.totalorder %s17, 1
      %p87 = por %p85, %p86
      %p88 = scmp.ne.s32.totalorder %s80, %s83
      %p89 = scmp.eq.s32.totalorder %s17, 0
      %p90 = por %p88, %p89
      %p91 = scmp.ne.s32.totalorder %s80, %s83
      %p92 = scmp.eq.s32.totalorder %s22, 1
      %p93 = por %p91, %p92
      %p94 = scmp.ne.s32.totalorder %s83, %s84
      %p95 = scmp.eq.s32.totalorder %s22, 0
      %p96 = por %p94, %p95
      %p97 = scmp.ne.s32.totalorder %s83, %s84
      %p98 = scmp.eq.s32.totalorder %s23, 1
      %p99 = por %p97, %p98
      %p101 = scmp.ne.s32.totalorder %s84, %s100
      %p102 = scmp.eq.s32.totalorder %s23, 0
      %p103 = por %p101, %p102
      %s104 = ssub.s32 %s24, %s43
      %s105 = ssub.s32 %s25, %s39
      %s106 = sor.u32 %s104, %s105
      %p107 = scmp.eq.s32.totalorder %s106, 0
      %s109 = sadd.s32 %s108, 1
      %s110 = scalar_select %p107, %s108, %s109
      %p113 = pneg %p107
      %p114 = scmp.eq.s32.totalorder %s17, 1
      %p115 = por %p113, %p114
      %p116 = scmp.ne.s32.totalorder %s108, %s111
      %p117 = scmp.eq.s32.totalorder %s17, 0
      %p118 = por %p116, %p117
      %p119 = scmp.ne.s32.totalorder %s108, %s111
      %p120 = scmp.eq.s32.totalorder %s22, 1
      %p121 = por %p119, %p120
      %p122 = scmp.ne.s32.totalorder %s111, %s112
      %p123 = scmp.eq.s32.totalorder %s22, 0
      %p124 = por %p122, %p123
      %p125 = scmp.ne.s32.totalorder %s111, %s112
      %p126 = scmp.eq.s32.totalorder %s23, 1
      %p127 = por %p125, %p126
      %p129 = scmp.ne.s32.totalorder %s112, %s128
      %p130 = scmp.eq.s32.totalorder %s23, 0
      %p131 = por %p129, %p130
      %p132 = scmp.le.s32.totalorder 1, %s17
      %p133 = scmp.lt.s32.totalorder %s17, 3
      %p134 = pnand %p132, %p133
      %p135 = pneg %p134
      // Predicated region
      $region9: #{tpu_custom_call.1} parent=5 // pred_check
        _
      $region10: #{tpu_custom_call.1} parent=5 // pred_check_branch
        %137 = sbr.rel (%p134) target = $region12
      $region11: #{tpu_custom_call.1} parent=5 // pred_region
        %s138 = ssub.s32 %s17, 1
      $region12: #{tpu_custom_call.1} parent=5 // pred_fallthru
        _
      %p139 = scmp.lt.s32.totalorder %s17, 2
      // Predicated region
      $region13: #{tpu_custom_call.1} parent=5 // pred_check
        %p140 = pneg %p139
      $region14: #{tpu_custom_call.1} parent=5 // pred_check_branch
        %142 = sbr.rel (%p140) target = $region16
      $region15: #{tpu_custom_call.1} parent=5 // pred_region
        // Predicated region
        $region17: #{tpu_custom_call.1} parent=15 // pred_check
          %p143 = pneg %p60
        $region18: #{tpu_custom_call.1} parent=15 // pred_check_branch
          %145 = sbr.rel (%p143) target = $region20
        $region19: #{tpu_custom_call.1} parent=15 // pred_region
          %s146 = sand.u32 %s50, 1
          %s147 = scalar_lea.sflag [#allocation6], %s146
          %s148 = sand.u32 %s50, 1
          %s149 = smul.addr %s148, 8
          %s150 = scalar_lea.vmem [#allocation5], %s149
          %s151 = sadd.s32 %s25, %s26
          %s153 = ssub.s32 128, 128
          %154 = vsyncadd %s147, %s153
          %s155 = smul.addr %s24, 4
          %s156 = sadd.s32 %s151, %s155
          %s157 = smul.addr %s156, 32
          %s158 = scalar_lea.hbm %s0, %s157
          %s159 = sshll.u32 %s150, 4
          %s160 = int_to_ptr.vmem [resolvable:$true] %s159
          %165 = dma.hbm_to_vmem [thread:$0]  %s158, 128, %s160, %s147, 32, 32, 2
        $region20: #{tpu_custom_call.1} parent=15 // pred_fallthru
          _
        // Predicated region
        $region21: #{tpu_custom_call.1} parent=15 // pred_check
          %p166 = pneg %p90
        $region22: #{tpu_custom_call.1} parent=15 // pred_check_branch
          %168 = sbr.rel (%p166) target = $region24
        $region23: #{tpu_custom_call.1} parent=15 // pred_region
          %s169 = sand.u32 %s80, 1
          %s170 = scalar_lea.sflag [#allocation9], %s169
          %s171 = sand.u32 %s80, 1
          %s172 = smul.addr %s171, 8
          %s173 = scalar_lea.vmem [#allocation8], %s172
          %s174 = sadd.s32 %s25, %s26
          %s176 = ssub.s32 128, 128
          %177 = vsyncadd %s170, %s176
          %s178 = smul.addr %s24, 4
          %s179 = sadd.s32 %s174, %s178
          %s180 = smul.addr %s179, 32
          %s181 = scalar_lea.hbm %s1, %s180
          %s182 = sshll.u32 %s173, 4
          %s183 = int_to_ptr.vmem [resolvable:$true] %s182
          %188 = dma.hbm_to_vmem [thread:$0]  %s181, 128, %s183, %s170, 32, 32, 2
        $region24: #{tpu_custom_call.1} parent=15 // pred_fallthru
          _
      $region16: #{tpu_custom_call.1} parent=5 // pred_fallthru
        _
      %p189 = scmp.le.s32.totalorder 1, %s17
      %p190 = scmp.lt.s32.totalorder %s17, 3
      %p191 = pnand %p189, %p190
      %p192 = pneg %p191
      // Predicated region
      $region25: #{tpu_custom_call.1} parent=5 // pred_check
        _
      $region26: #{tpu_custom_call.1} parent=5 // pred_check_branch
        %194 = sbr.rel (%p191) target = $region28
      $region27: #{tpu_custom_call.1} parent=5 // pred_region
        %s195 = ssub.s32 %s17, 1
        %s196 = sand.u32 %s53, 1
        %s197 = scalar_lea.sflag [#allocation6], %s196
        %s198 = sand.u32 %s53, 1
        %s199 = smul.addr %s198, 8
        %s200 = scalar_lea.vmem [#allocation5], %s199
        // Predicated region
        $region29: #{tpu_custom_call.1} parent=27 // pred_check
          %p201 = pneg %p66
        $region30: #{tpu_custom_call.1} parent=27 // pred_check_branch
          %203 = sbr.rel (%p201) target = $region32
        $region31: #{tpu_custom_call.1} parent=27 // pred_region
          %204 = dma.done %s197, 128
        $region32: #{tpu_custom_call.1} parent=27 // pred_fallthru
          _
        %s205 = sand.u32 %s83, 1
        %s206 = scalar_lea.sflag [#allocation9], %s205
        %s207 = sand.u32 %s83, 1
        %s208 = smul.addr %s207, 8
        %s209 = scalar_lea.vmem [#allocation8], %s208
        // Predicated region
        $region33: #{tpu_custom_call.1} parent=27 // pred_check
          %p210 = pneg %p96
        $region34: #{tpu_custom_call.1} parent=27 // pred_check_branch
          %212 = sbr.rel (%p210) target = $region36
        $region35: #{tpu_custom_call.1} parent=27 // pred_region
          %213 = dma.done %s206, 128
        $region36: #{tpu_custom_call.1} parent=27 // pred_fallthru
          _
        %s214 = sand.u32 %s53, 1
        %s215 = scalar_lea.sflag [#allocation6], %s214
        %s216 = sand.u32 %s53, 1
        %s217 = smul.addr %s216, 8
        %s218 = scalar_lea.vmem [#allocation5], %s217
        %p219 = pneg %p66
        %p220 = pneg %p63
        %s221 = sand.u32 %s83, 1
        %s222 = scalar_lea.sflag [#allocation9], %s221
        %s223 = sand.u32 %s83, 1
        %s224 = smul.addr %s223, 8
        %s225 = scalar_lea.vmem [#allocation8], %s224
        %p226 = pneg %p96
        %p227 = pneg %p93
        %p228 = pneg %p124
        %p229 = pneg %p121
        %s230 = sand.u32 %s111, 1
        %s231 = scalar_lea.sflag [#allocation7], %s230
        %s232 = sand.u32 %s111, 1
        %s233 = smul.addr %s232, 12
        %s234 = scalar_lea.vmem [#allocation10], %s233
        %s235 = sadd.s32 %s28, %s29
        %s236 = sadd.s32 %s28, %s29
        %p237 = scmp.eq.s32.totalorder %s29, 0
        // Predicated region
        $region37: #{tpu_custom_call.1} parent=27 // pred_check
          %p238 = pneg %p237
        $region38: #{tpu_custom_call.1} parent=27 // pred_check_branch
          %240 = sbr.rel (%p238) target = $region40
        $region39: #{tpu_custom_call.1} parent=27 // pred_region
          %241 = vst [vmem:[#allocation2] sm:$0xf] 0.0
          %242 = vst [vmem:[#allocation3] sm:$0xf] 0.0
          %243 = vst [vmem:[#allocation4] sm:$0xf] 0.0
        $region40: #{tpu_custom_call.1} parent=27 // pred_fallthru
          _
        %v244 = vld [vmem:[%s200] sm:$0x3]
        %v245 = vld [vmem:[%s200 + $0x2] sm:$0x3]
        %v246 = vld [vmem:[%s200 + $0x4] sm:$0x3]
        %v247 = vld [vmem:[%s200 + $0x6] sm:$0x3]
        %v248 = vld [vmem:[%s209] sm:$0x3]
        %v249 = vld [vmem:[%s209 + $0x2] sm:$0x3]
        %v250 = vld [vmem:[%s209 + $0x4] sm:$0x3]
        %v251 = vld [vmem:[%s209 + $0x6] sm:$0x3]
        %vm252 = vcmask 1041408
        %v253 = vsel %vm252, %v244, -inf
        %v254 = vsel %vm252, %v245, -inf
        %v255 = vsel %vm252, %v246, -inf
        %v256 = vsel %vm252, %v247, -inf
        %v257 = vmax.f32 %v253, %v254
        %v258 = vmax.f32 %v255, %v256
        %v259 = vmax.f32 %v257, %v258
        %v260 = vsub.f32 %v244, %v259
        %v261 = vsub.f32 %v245, %v259
        %v262 = vsub.f32 %v246, %v259
        %v263 = vsub.f32 %v247, %v259
        %v264 = vmul.f32 %v260, 1.442695
        %v265 = vpow.pop %v264
        %v266 = vmul.f32 %v261, 1.442695
        %v267 = vpow.pop %v266
        %v268 = vmul.f32 %v262, 1.442695
        %v269 = vpow.pop %v268
        %v270 = vmul.f32 %v263, 1.442695
        %v271 = vpow.pop %v270
        %v272 = vsel %vm252, %v265, 0.0
        %v273 = vsel %vm252, %v267, 0.0
        %v274 = vadd.f32 %v272, %v273
        %v275 = vsel %vm252, %v269, 0.0
        %v276 = vadd.f32 %v274, %v275
        %v277 = vsel %vm252, %v271, 0.0
        %v278 = vadd.f32 %v276, %v277
        %v279 = vrcp.pop %v278
        %v280 = vmul.f32 %v265, %v279
        %v281 = vmul.f32 %v267, %v279
        %v282 = vmul.f32 %v269, %v279
        %v283 = vmul.f32 %v271, %v279
        %v284 = vld [vmem:[#allocation2] sm:$0xf]
        %v285 = vmul.f32 %v280, %v248
        %v286 = vmul.f32 %v281, %v249
        %v287 = vmul.f32 %v282, %v250
        %v288 = vmul.f32 %v283, %v251
        %v289 = vsel %vm252, %v285, 0.0
        %v290 = vrot.slane %v289, 4
        %v291 = vadd.f32 %v289, %v290
        %v292 = vrot.slane %v291, 2
        %v293 = vadd.f32 %v291, %v292
        %v294 = vrot.slane %v293, 1
        %v295 = vadd.f32 %v293, %v294
        %v296 = vsel %vm252, %v286, 0.0
        %v297 = vrot.slane %v296, 4
        %v298 = vadd.f32 %v296, %v297
        %v299 = vrot.slane %v298, 2
        %v300 = vadd.f32 %v298, %v299
        %v301 = vrot.slane %v300, 1
        %v302 = vadd.f32 %v300, %v301
        %v303 = vsel %vm252, %v287, 0.0
        %v304 = vrot.slane %v303, 4
        %v305 = vadd.f32 %v303, %v304
        %v306 = vrot.slane %v305, 2
        %v307 = vadd.f32 %v305, %v306
        %v308 = vrot.slane %v307, 1
        %v309 = vadd.f32 %v307, %v308
        %v310 = vsel %vm252, %v288, 0.0
        %v311 = vrot.slane %v310, 4
        %v312 = vadd.f32 %v310, %v311
        %v313 = vrot.slane %v312, 2
        %v314 = vadd.f32 %v312, %v313
        %v315 = vrot.slane %v314, 1
        %v316 = vadd.f32 %v314, %v315
        %vm321 = vcmask 1041409
        %v322 = vsel %vm321, %v302, %v295
        %vm323 = vcmask 1042434
        %v324 = vsel %vm323, %v309, %v322
        %vm325 = vcmask 1043459
        %v326 = vsel %vm325, %v316, %v324
        %v328 = vadd.f32 %v284, %v326
        %329 = vst [vmem:[#allocation2] sm:$0xf] %v328
        %v330 = vld [vmem:[#allocation3] sm:$0xf]
        %v331 = vsel %vm252, %v280, 0.0
        %v332 = vrot.slane %v331, 4
        %v333 = vadd.f32 %v331, %v332
        %v334 = vrot.slane %v333, 2
        %v335 = vadd.f32 %v333, %v334
        %v336 = vrot.slane %v335, 1
        %v337 = vadd.f32 %v335, %v336
        %v338 = vsel %vm252, %v281, 0.0
        %v339 = vrot.slane %v338, 4
        %v340 = vadd.f32 %v338, %v339
        %v341 = vrot.slane %v340, 2
        %v342 = vadd.f32 %v340, %v341
        %v343 = vrot.slane %v342, 1
        %v344 = vadd.f32 %v342, %v343
        %v345 = vsel %vm252, %v282, 0.0
        %v346 = vrot.slane %v345, 4
        %v347 = vadd.f32 %v345, %v346
        %v348 = vrot.slane %v347, 2
        %v349 = vadd.f32 %v347, %v348
        %v350 = vrot.slane %v349, 1
        %v351 = vadd.f32 %v349, %v350
        %v352 = vsel %vm252, %v283, 0.0
        %v353 = vrot.slane %v352, 4
        %v354 = vadd.f32 %v352, %v353
        %v355 = vrot.slane %v354, 2
        %v356 = vadd.f32 %v354, %v355
        %v357 = vrot.slane %v356, 1
        %v358 = vadd.f32 %v356, %v357
        %v363 = vsel %vm321, %v344, %v337
        %v364 = vsel %vm323, %v351, %v363
        %v365 = vsel %vm325, %v358, %v364
        %v367 = vadd.f32 %v330, %v365
        %368 = vst [vmem:[#allocation3] sm:$0xf] %v367
        %v369 = vld [vmem:[#allocation4] sm:$0xf]
        %v370 = vsel %vm252, %v248, 0.0
        %v371 = vrot.slane %v370, 4
        %v372 = vadd.f32 %v370, %v371
        %v373 = vrot.slane %v372, 2
        %v374 = vadd.f32 %v372, %v373
        %v375 = vrot.slane %v374, 1
        %v376 = vadd.f32 %v374, %v375
        %v377 = vsel %vm252, %v249, 0.0
        %v378 = vrot.slane %v377, 4
        %v379 = vadd.f32 %v377, %v378
        %v380 = vrot.slane %v379, 2
        %v381 = vadd.f32 %v379, %v380
        %v382 = vrot.slane %v381, 1
        %v383 = vadd.f32 %v381, %v382
        %v384 = vsel %vm252, %v250, 0.0
        %v385 = vrot.slane %v384, 4
        %v386 = vadd.f32 %v384, %v385
        %v387 = vrot.slane %v386, 2
        %v388 = vadd.f32 %v386, %v387
        %v389 = vrot.slane %v388, 1
        %v390 = vadd.f32 %v388, %v389
        %v391 = vsel %vm252, %v251, 0.0
        %v392 = vrot.slane %v391, 4
        %v393 = vadd.f32 %v391, %v392
        %v394 = vrot.slane %v393, 2
        %v395 = vadd.f32 %v393, %v394
        %v396 = vrot.slane %v395, 1
        %v397 = vadd.f32 %v395, %v396
        %v402 = vsel %vm321, %v383, %v376
        %v403 = vsel %vm323, %v390, %v402
        %v404 = vsel %vm325, %v397, %v403
        %v406 = vadd.f32 %v369, %v404
        %407 = vst [vmem:[#allocation4] sm:$0xf] %v406
        // Predicated region
        $region41: #{tpu_custom_call.1} parent=27 // pred_check
          %p408 = pneg %p237
        $region42: #{tpu_custom_call.1} parent=27 // pred_check_branch
          %410 = sbr.rel (%p408) target = $region44
        $region43: #{tpu_custom_call.1} parent=27 // pred_region
          %v411 = vld [vmem:[#allocation2] sm:$0xf]
          %412 = vst [vmem:[%s234] sm:$0xf] %v411
          %v413 = vld [vmem:[#allocation3] sm:$0xf]
          %s414 = scalar_lea.vmem %s234, 4 [#allocation10]
          %415 = vst [vmem:[%s414] sm:$0xf] %v413
          %v416 = vld [vmem:[#allocation4] sm:$0xf]
          %s417 = scalar_lea.vmem %s234, 8 [#allocation10]
          %418 = vst [vmem:[%s417] sm:$0xf] %v416
        $region44: #{tpu_custom_call.1} parent=27 // pred_fallthru
          _
        %s419 = sand.u32 %s111, 1
        %s420 = scalar_lea.sflag [#allocation7], %s419
        %s421 = sand.u32 %s111, 1
        %s422 = smul.addr %s421, 12
        %s423 = scalar_lea.vmem [#allocation10], %s422
        // Predicated region
        $region45: #{tpu_custom_call.1} parent=27 // pred_check
          %p424 = pneg %p121
        $region46: #{tpu_custom_call.1} parent=27 // pred_check_branch
          %426 = sbr.rel (%p424) target = $region48
        $region47: #{tpu_custom_call.1} parent=27 // pred_region
          %s428 = ssub.s32 192, 192
          %429 = vsyncadd %s420, %s428
          %s430 = smul.addr %s28, 3
          %s431 = smul.addr %s27, 3
          %s432 = sadd.s32 %s430, %s431
          %s433 = smul.addr %s432, 64
          %s434 = scalar_lea.hbm %s2, %s433
          %s435 = sshll.u32 %s423, 4
          %s436 = int_to_ptr.vmem [resolvable:$true] %s435
          %441 = dma.vmem_to_hbm [thread:$0]  %s436, 192, %s434, %s420, 64, 64, 4
        $region48: #{tpu_custom_call.1} parent=27 // pred_fallthru
          _
      $region28: #{tpu_custom_call.1} parent=5 // pred_fallthru
        _
      %p442 = scmp.le.s32.totalorder 2, %s17
      // Predicated region
      $region49: #{tpu_custom_call.1} parent=5 // pred_check
        %p443 = pneg %p442
      $region50: #{tpu_custom_call.1} parent=5 // pred_check_branch
        %445 = sbr.rel (%p443) target = $region52
      $region51: #{tpu_custom_call.1} parent=5 // pred_region
        %s446 = ssub.s32 %s17, 2
        // Predicated region
        $region53: #{tpu_custom_call.1} parent=51 // pred_check
          %p447 = pneg %p127
        $region54: #{tpu_custom_call.1} parent=51 // pred_check_branch
          %449 = sbr.rel (%p447) target = $region56
        $region55: #{tpu_custom_call.1} parent=51 // pred_region
          %s450 = sand.u32 %s112, 1
          %s451 = scalar_lea.sflag [#allocation7], %s450
          %s452 = sand.u32 %s112, 1
          %s453 = smul.addr %s452, 12
          %s454 = scalar_lea.vmem [#allocation10], %s453
          %455 = dma.done %s451, 192
        $region56: #{tpu_custom_call.1} parent=51 // pred_fallthru
          _
      $region52: #{tpu_custom_call.1} parent=5 // pred_fallthru
        _
    $region6: #{tpu_custom_call.1} parent=1 // loop_footer
      %s21 = sadd.s32 1, %s17
    $region7: #{tpu_custom_call.1} parent=1 // loop_footer_branch
      %16 = sbr.rel target = $region3
    $region8: #{tpu_custom_call.1} parent=1 // loop_exit
      _
    %456 = vsyncpa [#allocation6], 1
    %s457 = scalar_lea.sflag [#allocation6], 1
    %458 = vsyncpa %s457, 1
    %459 = vsyncpa [#allocation9], 1
    %s460 = scalar_lea.sflag [#allocation9], 1
    %461 = vsyncpa %s460, 1
    %462 = vsyncpa [#allocation7], 1
    %s463 = scalar_lea.sflag [#allocation7], 1
    %464 = vsyncpa %s463, 1

</llo_original>
